<compile_context>
chip_gen: v7x
topology: tpu7x:2x2x1
jax: 0.10.0
libtpu: 0.0.40
codegen_flags: <defaults>
</compile_context>

<pallas_src>
import functools

import jax
import jax.numpy as jnp
from jax.experimental import pallas as pl
from jax.experimental.pallas import tpu as pltpu

_LANE = 128


def _round_up(x, m):
    return (x + m - 1) // m * m


def _cssh_logit_kernel(x_ref, w1_ref, b1_ref, w2_ref, b2_ref, w3_ref, b3_ref,
                       o_ref):
    """Fused 3-layer MLP: relu(x@W1+b1) @W2+b2 -> relu -> @W3+b3.

    All matmul operands are bf16 (MXU native rate on v6e/v7x), accumulation
    and bias/ReLU math in f32.  Dropout layers are identity (eval mode).
    """
    h1 = jnp.dot(x_ref[...], w1_ref[...], preferred_element_type=jnp.float32)
    h1 = jnp.maximum(h1 + b1_ref[...], 0.0)           # ReLU (dropout = identity)

    h2 = jnp.dot(h1.astype(w2_ref.dtype), w2_ref[...],
                 preferred_element_type=jnp.float32)
    h2 = jnp.maximum(h2 + b2_ref[...], 0.0)           # ReLU (dropout = identity)

    out = jnp.dot(h2.astype(w3_ref.dtype), w3_ref[...],
                  preferred_element_type=jnp.float32)
    o_ref[...] = (out + b3_ref[...]).astype(o_ref.dtype)


@functools.partial(jax.jit, static_argnames=("block_b",))
def csshar_logit_forward(x, w1, b1, w2, b2, w3, b3, *, block_b=512):
    """x: (B, input_seq*96) -> logits (B, num_classes).

    Weights are expected pre-transposed to (in, out); biases as (1, out).
    block_b is the batch tile; sweep 512-2048 for large batches.  Any batch
    size is accepted (tail rows are zero-padded and sliced off).
    """
    B, D = x.shape
    H1 = w1.shape[1]
    H2 = w2.shape[1]
    C = w3.shape[1]

    # Effective batch tile: multiple of 8 sublanes, never bigger than the
    # (rounded-up) batch itself.
    blk = max(8, min(_round_up(block_b, 8), _round_up(B, 8)))
    B_pad = _round_up(B, blk)

    # Lane-dense output: pad num_classes up to a full 128-lane width so the
    # final store is unmasked; the extra columns of W3/b3 are zeros.
    C_pad = _round_up(C, _LANE)

    # bf16 matmul operands (f32 accumulation inside the kernel); biases f32.
    x_p = jnp.pad(x, ((0, B_pad - B), (0, 0))).astype(jnp.bfloat16)
    w1b = w1.astype(jnp.bfloat16)
    w2b = w2.astype(jnp.bfloat16)
    w3b = jnp.pad(w3, ((0, 0), (0, C_pad - C))).astype(jnp.bfloat16)
    b1f = b1.astype(jnp.float32)
    b2f = b2.astype(jnp.float32)
    b3f = jnp.pad(b3, ((0, 0), (0, C_pad - C))).astype(jnp.float32)

    grid = (B_pad // blk,)
    const = lambda i: (0, 0)
    single = pl.Buffered(1)   # constant blocks: fetched once, no double buffer

    out = pl.pallas_call(
        _cssh_logit_kernel,
        out_shape=jax.ShapeDtypeStruct((B_pad, C_pad), jnp.float32),
        grid_spec=pltpu.PrefetchScalarGridSpec(
            num_scalar_prefetch=0,
            grid=grid,
            in_specs=[
                # activations: tiled along batch (double-buffered by default)
                pl.BlockSpec((blk, D), lambda i: (i, 0)),
                # weights / biases: full blocks, resident across grid steps
                pl.BlockSpec((D, H1), const, pipeline_mode=single),
                pl.BlockSpec((1, H1), const, pipeline_mode=single),
                pl.BlockSpec((H1, H2), const, pipeline_mode=single),
                pl.BlockSpec((1, H2), const, pipeline_mode=single),
                pl.BlockSpec((H2, C_pad), const, pipeline_mode=single),
                pl.BlockSpec((1, C_pad), const, pipeline_mode=single),
            ],
            out_specs=pl.BlockSpec((blk, C_pad), lambda i: (i, 0)),
        ),
        compiler_params=pltpu.CompilerParams(
            dimension_semantics=("parallel",)),
    )(x_p, w1b, b1f, w2b, b2f, w3b, b3f)

    return out[:B, :C]


def _init_linear(key, fan_in, fan_out, dtype=jnp.float32):
    """PyTorch nn.Linear default init: U(-1/sqrt(fan_in), 1/sqrt(fan_in)).

    Returns W with shape (fan_in, fan_out) (already transposed for x @ W) and
    bias with shape (1, fan_out).
    """
    kw, kb = jax.random.split(key)
    bound = 1.0 / jnp.sqrt(jnp.asarray(fan_in, dtype))
    w = jax.random.uniform(kw, (fan_in, fan_out), dtype, -bound, bound)
    b = jax.random.uniform(kb, (1, fan_out), dtype, -bound, bound)
    return w, b


def _reference_forward(x, w1, b1, w2, b2, w3, b3):
    """Numerics-matched reference: bf16 operands, f32 accumulation."""
    bf = jnp.bfloat16
    h1 = jnp.maximum(
        jnp.dot(x.astype(bf), w1.astype(bf),
                preferred_element_type=jnp.float32) + b1, 0.0)
    h2 = jnp.maximum(
        jnp.dot(h1.astype(bf), w2.astype(bf),
                preferred_element_type=jnp.float32) + b2, 0.0)
    return jnp.dot(h2.astype(bf), w3.astype(bf),
                   preferred_element_type=jnp.float32) + b3


if __name__ == "__main__":
    # Small shapes consistent with the module.
    input_seq = 2                 # -> input dim = input_seq * 96 = 192
    num_classes = 6
    batch = 12                    # not a multiple of the tile -> exercises padded tail

    D = input_seq * 96

    key = jax.random.PRNGKey(0)
    kx, k1, k2, k3 = jax.random.split(key, 4)

    x = jax.random.normal(kx, (batch, D), jnp.float32)

    w1, b1 = _init_linear(k1, D, 96)
    w2, b2 = _init_linear(k2, 96, 64)
    w3, b3 = _init_linear(k3, 64, num_classes)

    # block_b=8 here only to keep the demo tiny AND give a 2-step grid
    # (B_pad=16 -> grid=(2,), exercising both padding and megacore sharding).
    out = csshar_logit_forward(x, w1, b1, w2, b2, w3, b3, block_b=8)
    out = jax.block_until_ready(out)

    ref = _reference_forward(x, w1, b1, w2, b2, w3, b3)
    assert out.shape == (batch, num_classes)
    assert jnp.allclose(out, ref, atol=1e-3, rtol=1e-3), "mismatch vs reference"

    print("KERNEL_OK")
</pallas_src>

<mosaic_0001>
module attributes {stable_mosaic.version = 11 : i64} {
  func.func @_cssh_logit_kernel(%arg0: i32, %arg1: memref<8x192xbf16, #tpu.memory_space<vmem>>, %arg2: memref<192x96xbf16, #tpu.memory_space<vmem>>, %arg3: memref<1x96xf32, #tpu.memory_space<vmem>>, %arg4: memref<96x64xbf16, #tpu.memory_space<vmem>>, %arg5: memref<1x64xf32, #tpu.memory_space<vmem>>, %arg6: memref<64x128xbf16, #tpu.memory_space<vmem>>, %arg7: memref<1x128xf32, #tpu.memory_space<vmem>>, %arg8: memref<8x128xf32, #tpu.memory_space<vmem>>) attributes {dimension_semantics = [#tpu.dimension_semantics<parallel>], iteration_bounds = array<i64: 2>, scalar_prefetch = 0 : i64, scratch_operands = 0 : i64, tpu.core_type = #tpu.core_type<tc>, window_params = [{transform_indices = @transform_0, window_bounds = array<i64: 8, 192>}, {pipeline_mode = #tpu.pipeline_mode<synchronous>, transform_indices = @transform_1, window_bounds = array<i64: 192, 96>}, {pipeline_mode = #tpu.pipeline_mode<synchronous>, transform_indices = @transform_2, window_bounds = array<i64: 1, 96>}, {pipeline_mode = #tpu.pipeline_mode<synchronous>, transform_indices = @transform_3, window_bounds = array<i64: 96, 64>}, {pipeline_mode = #tpu.pipeline_mode<synchronous>, transform_indices = @transform_4, window_bounds = array<i64: 1, 64>}, {pipeline_mode = #tpu.pipeline_mode<synchronous>, transform_indices = @transform_5, window_bounds = array<i64: 64, 128>}, {pipeline_mode = #tpu.pipeline_mode<synchronous>, transform_indices = @transform_6, window_bounds = array<i64: 1, 128>}, {transform_indices = @transform_7, window_bounds = array<i64: 8, 128>}]} {
    %c0 = arith.constant 0 : index
    %c0_0 = arith.constant 0 : index
    %0 = vector.load %arg1[%c0, %c0_0] : memref<8x192xbf16, #tpu.memory_space<vmem>>, vector<8x192xbf16>
    %c0_1 = arith.constant 0 : index
    %c0_2 = arith.constant 0 : index
    %1 = vector.load %arg2[%c0_1, %c0_2] : memref<192x96xbf16, #tpu.memory_space<vmem>>, vector<192x96xbf16>
    %cst = arith.constant dense<0.000000e+00> : vector<8x96xf32>
    %2 = tpu.matmul %0, %1, %cst {dimension_numbers = #tpu.dot_dimension_numbers<[1], [0], [0], [1], [0, 0, 1, 1], [], []>} : vector<8x192xbf16>, vector<192x96xbf16>, vector<8x96xf32> -> vector<8x96xf32>
    %c0_3 = arith.constant 0 : index
    %c0_4 = arith.constant 0 : index
    %3 = vector.load %arg3[%c0_3, %c0_4] : memref<1x96xf32, #tpu.memory_space<vmem>>, vector<1x96xf32>
    %4 = vector.broadcast %3 : vector<1x96xf32> to vector<8x96xf32>
    %5 = arith.addf %2, %4 : vector<8x96xf32>
    %cst_5 = arith.constant 0.000000e+00 : f32
    %6 = vector.broadcast %cst_5 : f32 to vector<8x96xf32>
    %7 = arith.maximumf %5, %6 : vector<8x96xf32>
    %8 = arith.truncf %7 : vector<8x96xf32> to vector<8x96xbf16>
    %c0_6 = arith.constant 0 : index
    %c0_7 = arith.constant 0 : index
    %9 = vector.load %arg4[%c0_6, %c0_7] : memref<96x64xbf16, #tpu.memory_space<vmem>>, vector<96x64xbf16>
    %cst_8 = arith.constant dense<0.000000e+00> : vector<8x64xf32>
    %10 = tpu.matmul %8, %9, %cst_8 {dimension_numbers = #tpu.dot_dimension_numbers<[1], [0], [0], [1], [0, 0, 1, 1], [], []>} : vector<8x96xbf16>, vector<96x64xbf16>, vector<8x64xf32> -> vector<8x64xf32>
    %c0_9 = arith.constant 0 : index
    %c0_10 = arith.constant 0 : index
    %11 = vector.load %arg5[%c0_9, %c0_10] : memref<1x64xf32, #tpu.memory_space<vmem>>, vector<1x64xf32>
    %12 = vector.broadcast %11 : vector<1x64xf32> to vector<8x64xf32>
    %13 = arith.addf %10, %12 : vector<8x64xf32>
    %cst_11 = arith.constant 0.000000e+00 : f32
    %14 = vector.broadcast %cst_11 : f32 to vector<8x64xf32>
    %15 = arith.maximumf %13, %14 : vector<8x64xf32>
    %16 = arith.truncf %15 : vector<8x64xf32> to vector<8x64xbf16>
    %c0_12 = arith.constant 0 : index
    %c0_13 = arith.constant 0 : index
    %17 = vector.load %arg6[%c0_12, %c0_13] : memref<64x128xbf16, #tpu.memory_space<vmem>>, vector<64x128xbf16>
    %cst_14 = arith.constant dense<0.000000e+00> : vector<8x128xf32>
    %18 = tpu.matmul %16, %17, %cst_14 {dimension_numbers = #tpu.dot_dimension_numbers<[1], [0], [0], [1], [0, 0, 1, 1], [], []>} : vector<8x64xbf16>, vector<64x128xbf16>, vector<8x128xf32> -> vector<8x128xf32>
    %c0_15 = arith.constant 0 : index
    %c0_16 = arith.constant 0 : index
    %19 = vector.load %arg7[%c0_15, %c0_16] : memref<1x128xf32, #tpu.memory_space<vmem>>, vector<1x128xf32>
    %20 = vector.broadcast %19 : vector<1x128xf32> to vector<8x128xf32>
    %21 = arith.addf %18, %20 : vector<8x128xf32>
    %c0_17 = arith.constant 0 : index
    %c0_18 = arith.constant 0 : index
    %22 = vector.load %arg8[%c0_17, %c0_18] : memref<8x128xf32, #tpu.memory_space<vmem>>, vector<8x128xf32>
    tpu.vector_store %arg8[%c0_17, %c0_18], %21 {strides = array<i32>} : memref<8x128xf32, #tpu.memory_space<vmem>>, vector<8x128xf32>,
    return
  }
  func.func @transform_0(%arg0: i32) -> (i32, i32) {
    %c0_i32 = arith.constant 0 : i32
    %c0_i32_0 = arith.constant 0 : i32
    return %arg0, %c0_i32 : i32, i32
  }
  func.func @transform_1(%arg0: i32) -> (i32, i32) {
    %c0_i32 = arith.constant 0 : i32
    %c0_i32_0 = arith.constant 0 : i32
    %c0_i32_1 = arith.constant 0 : i32
    return %c0_i32, %c0_i32_0 : i32, i32
  }
  func.func @transform_2(%arg0: i32) -> (i32, i32) {
    %c0_i32 = arith.constant 0 : i32
    %c0_i32_0 = arith.constant 0 : i32
    %c0_i32_1 = arith.constant 0 : i32
    return %c0_i32, %c0_i32_0 : i32, i32
  }
  func.func @transform_3(%arg0: i32) -> (i32, i32) {
    %c0_i32 = arith.constant 0 : i32
    %c0_i32_0 = arith.constant 0 : i32
    %c0_i32_1 = arith.constant 0 : i32
    return %c0_i32, %c0_i32_0 : i32, i32
  }
  func.func @transform_4(%arg0: i32) -> (i32, i32) {
    %c0_i32 = arith.constant 0 : i32
    %c0_i32_0 = arith.constant 0 : i32
    %c0_i32_1 = arith.constant 0 : i32
    return %c0_i32, %c0_i32_0 : i32, i32
  }
  func.func @transform_5(%arg0: i32) -> (i32, i32) {
    %c0_i32 = arith.constant 0 : i32
    %c0_i32_0 = arith.constant 0 : i32
    %c0_i32_1 = arith.constant 0 : i32
    return %c0_i32, %c0_i32_0 : i32, i32
  }
  func.func @transform_6(%arg0: i32) -> (i32, i32) {
    %c0_i32 = arith.constant 0 : i32
    %c0_i32_0 = arith.constant 0 : i32
    %c0_i32_1 = arith.constant 0 : i32
    return %c0_i32, %c0_i32_0 : i32, i32
  }
  func.func @transform_7(%arg0: i32) -> (i32, i32) {
    %c0_i32 = arith.constant 0 : i32
    %c0_i32_0 = arith.constant 0 : i32
    return %arg0, %c0_i32 : i32, i32
  }
}

</mosaic_0001>

<llo_original>
// kernel: csshar_logit_forward.1
$region0: #{csshar_logit_forward.1}
  #allocation0 [shape = 'u32[]', space=smem, size = 0x4, offset = 0x4, fixed_abs, tag = 'smem constant byte address 0x4 - core index']
  #allocation1 [shape = 'u32[144,128]{1,0:T(1,128)}', space=vmem, size = 0x12000, scoped, tag = 'internal scratch']
  %s0 = inlined_call_operand.vmem [shape: bf16[16,192], index: 0, kind: input, shape index: {}]
  %s1 = inlined_call_operand.vmem [shape: bf16[192,96], index: 1, kind: input, shape index: {}]
  %s2 = inlined_call_operand.vmem [shape: f32[1,96], index: 2, kind: input, shape index: {}]
  %s3 = inlined_call_operand.vmem [shape: bf16[96,64], index: 3, kind: input, shape index: {}]
  %s4 = inlined_call_operand.vmem [shape: f32[1,64], index: 4, kind: input, shape index: {}]
  %s5 = inlined_call_operand.vmem [shape: bf16[64,128], index: 5, kind: input, shape index: {}]
  %s6 = inlined_call_operand.vmem [shape: f32[1,128], index: 6, kind: input, shape index: {}]
  %s7 = inlined_call_operand.vmem [shape: f32[16,128], index: 7, kind: output, shape index: {}]
  %s8 = sld [smem:[#allocation0]]
  $region61: #{csshar_logit_forward.1} parent=0
    _
  %s10 = ssub.s32 1, %s8
  %s11 = scalar_select 0, %s10, %s8
  loop: start=0, step=1, limit=4
  $region2: #{csshar_logit_forward.1} parent=0 // loop_pre_header
    _
  $region3: #{csshar_logit_forward.1} parent=0 // loop_header
    %s13 = sphi 0, %s17
    %p14 = scmp.ge.s32.totalorder %s13, 4
    %s23 = sphi 0, %s25
    %s26 = sphi 0, %s23
    %s27 = sphi 0, %s26
    %s43 = sphi 0, %s27
    %s47 = sphi 0, %s47
    %s49 = sphi 0, %s47
    %s50 = sphi 0, %s49
    %s64 = sphi 0, %s50
    %s68 = sphi 0, %s68
    %s70 = sphi 0, %s68
    %s71 = sphi 0, %s70
    %s85 = sphi 0, %s71
    %s89 = sphi 0, %s89
    %s91 = sphi 0, %s89
    %s92 = sphi 0, %s91
    %s106 = sphi 0, %s92
    %s110 = sphi 0, %s110
    %s112 = sphi 0, %s110
    %s113 = sphi 0, %s112
    %s127 = sphi 0, %s113
    %s131 = sphi 0, %s131
    %s133 = sphi 0, %s131
    %s134 = sphi 0, %s133
    %s148 = sphi 0, %s134
    %s152 = sphi 0, %s152
    %s154 = sphi 0, %s152
    %s155 = sphi 0, %s154
    %s169 = sphi 0, %s155
    %s175 = sphi 0, %s177
    %s178 = sphi 0, %s175
    %s179 = sphi 0, %s178
    %s195 = sphi 0, %s179
  $region4: #{csshar_logit_forward.1} parent=0 // loop_header_branch
    %16 = sbr.rel (%p14) target = $region8
  $region5: #{csshar_logit_forward.1} parent=0 // loop_body
    %s18 = ssub.s32 %s13, 1
    %s19 = ssub.s32 %s13, 2
    %s20 = sadd.s32 %s13, 1
    %s21 = ssub.s32 %s13, %s20
    %p22 = scmp.eq.s32.totalorder %s21, 0
    %s24 = sadd.s32 %s23, 1
    %s25 = scalar_select %p22, %s23, %s24
    %p28 = pneg %p22
    %p29 = scmp.eq.s32.totalorder %s13, 1
    %p30 = por %p28, %p29
    %p31 = scmp.ne.s32.totalorder %s23, %s26
    %p32 = scmp.eq.s32.totalorder %s13, 0
    %p33 = por %p31, %p32
    %p34 = scmp.ne.s32.totalorder %s23, %s26
    %p35 = scmp.eq.s32.totalorder %s18, 1
    %p36 = por %p34, %p35
    %p37 = scmp.ne.s32.totalorder %s26, %s27
    %p38 = scmp.eq.s32.totalorder %s18, 0
    %p39 = por %p37, %p38
    %p40 = scmp.ne.s32.totalorder %s26, %s27
    %p41 = scmp.eq.s32.totalorder %s19, 1
    %p42 = por %p40, %p41
    %p44 = scmp.ne.s32.totalorder %s27, %s43
    %p45 = scmp.eq.s32.totalorder %s19, 0
    %p46 = por %p44, %p45
    %s48 = sadd.s32 %s47, 1
    %p51 = scmp.eq.s32.totalorder %s13, 1
    %p52 = scmp.ne.s32.totalorder %s47, %s49
    %p53 = scmp.eq.s32.totalorder %s13, 0
    %p54 = por %p52, %p53
    %p55 = scmp.ne.s32.totalorder %s47, %s49
    %p56 = scmp.eq.s32.totalorder %s18, 1
    %p57 = por %p55, %p56
    %p58 = scmp.ne.s32.totalorder %s49, %s50
    %p59 = scmp.eq.s32.totalorder %s18, 0
    %p60 = por %p58, %p59
    %p61 = scmp.ne.s32.totalorder %s49, %s50
    %p62 = scmp.eq.s32.totalorder %s19, 1
    %p63 = por %p61, %p62
    %p65 = scmp.ne.s32.totalorder %s50, %s64
    %p66 = scmp.eq.s32.totalorder %s19, 0
    %p67 = por %p65, %p66
    %s69 = sadd.s32 %s68, 1
    %p72 = scmp.eq.s32.totalorder %s13, 1
    %p73 = scmp.ne.s32.totalorder %s68, %s70
    %p74 = scmp.eq.s32.totalorder %s13, 0
    %p75 = por %p73, %p74
    %p76 = scmp.ne.s32.totalorder %s68, %s70
    %p77 = scmp.eq.s32.totalorder %s18, 1
    %p78 = por %p76, %p77
    %p79 = scmp.ne.s32.totalorder %s70, %s71
    %p80 = scmp.eq.s32.totalorder %s18, 0
    %p81 = por %p79, %p80
    %p82 = scmp.ne.s32.totalorder %s70, %s71
    %p83 = scmp.eq.s32.totalorder %s19, 1
    %p84 = por %p82, %p83
    %p86 = scmp.ne.s32.totalorder %s71, %s85
    %p87 = scmp.eq.s32.totalorder %s19, 0
    %p88 = por %p86, %p87
    %s90 = sadd.s32 %s89, 1
    %p93 = scmp.eq.s32.totalorder %s13, 1
    %p94 = scmp.ne.s32.totalorder %s89, %s91
    %p95 = scmp.eq.s32.totalorder %s13, 0
    %p96 = por %p94, %p95
    %p97 = scmp.ne.s32.totalorder %s89, %s91
    %p98 = scmp.eq.s32.totalorder %s18, 1
    %p99 = por %p97, %p98
    %p100 = scmp.ne.s32.totalorder %s91, %s92
    %p101 = scmp.eq.s32.totalorder %s18, 0
    %p102 = por %p100, %p101
    %p103 = scmp.ne.s32.totalorder %s91, %s92
    %p104 = scmp.eq.s32.totalorder %s19, 1
    %p105 = por %p103, %p104
    %p107 = scmp.ne.s32.totalorder %s92, %s106
    %p108 = scmp.eq.s32.totalorder %s19, 0
    %p109 = por %p107, %p108
    %s111 = sadd.s32 %s110, 1
    %p114 = scmp.eq.s32.totalorder %s13, 1
    %p115 = scmp.ne.s32.totalorder %s110, %s112
    %p116 = scmp.eq.s32.totalorder %s13, 0
    %p117 = por %p115, %p116
    %p118 = scmp.ne.s32.totalorder %s110, %s112
    %p119 = scmp.eq.s32.totalorder %s18, 1
    %p120 = por %p118, %p119
    %p121 = scmp.ne.s32.totalorder %s112, %s113
    %p122 = scmp.eq.s32.totalorder %s18, 0
    %p123 = por %p121, %p122
    %p124 = scmp.ne.s32.totalorder %s112, %s113
    %p125 = scmp.eq.s32.totalorder %s19, 1
    %p126 = por %p124, %p125
    %p128 = scmp.ne.s32.totalorder %s113, %s127
    %p129 = scmp.eq.s32.totalorder %s19, 0
    %p130 = por %p128, %p129
    %s132 = sadd.s32 %s131, 1
    %p135 = scmp.eq.s32.totalorder %s13, 1
    %p136 = scmp.ne.s32.totalorder %s131, %s133
    %p137 = scmp.eq.s32.totalorder %s13, 0
    %p138 = por %p136, %p137
    %p139 = scmp.ne.s32.totalorder %s131, %s133
    %p140 = scmp.eq.s32.totalorder %s18, 1
    %p141 = por %p139, %p140
    %p142 = scmp.ne.s32.totalorder %s133, %s134
    %p143 = scmp.eq.s32.totalorder %s18, 0
    %p144 = por %p142, %p143
    %p145 = scmp.ne.s32.totalorder %s133, %s134
    %p146 = scmp.eq.s32.totalorder %s19, 1
    %p147 = por %p145, %p146
    %p149 = scmp.ne.s32.totalorder %s134, %s148
    %p150 = scmp.eq.s32.totalorder %s19, 0
    %p151 = por %p149, %p150
    %s153 = sadd.s32 %s152, 1
    %p156 = scmp.eq.s32.totalorder %s13, 1
    %p157 = scmp.ne.s32.totalorder %s152, %s154
    %p158 = scmp.eq.s32.totalorder %s13, 0
    %p159 = por %p157, %p158
    %p160 = scmp.ne.s32.totalorder %s152, %s154
    %p161 = scmp.eq.s32.totalorder %s18, 1
    %p162 = por %p160, %p161
    %p163 = scmp.ne.s32.totalorder %s154, %s155
    %p164 = scmp.eq.s32.totalorder %s18, 0
    %p165 = por %p163, %p164
    %p166 = scmp.ne.s32.totalorder %s154, %s155
    %p167 = scmp.eq.s32.totalorder %s19, 1
    %p168 = por %p166, %p167
    %p170 = scmp.ne.s32.totalorder %s155, %s169
    %p171 = scmp.eq.s32.totalorder %s19, 0
    %p172 = por %p170, %p171
    %s173 = ssub.s32 %s13, %s20
    %p174 = scmp.eq.s32.totalorder %s173, 0
    %s176 = sadd.s32 %s175, 1
    %s177 = scalar_select %p174, %s175, %s176
    %p180 = pneg %p174
    %p181 = scmp.eq.s32.totalorder %s13, 1
    %p182 = por %p180, %p181
    %p183 = scmp.ne.s32.totalorder %s175, %s178
    %p184 = scmp.eq.s32.totalorder %s13, 0
    %p185 = por %p183, %p184
    %p186 = scmp.ne.s32.totalorder %s175, %s178
    %p187 = scmp.eq.s32.totalorder %s18, 1
    %p188 = por %p186, %p187
    %p189 = scmp.ne.s32.totalorder %s178, %s179
    %p190 = scmp.eq.s32.totalorder %s18, 0
    %p191 = por %p189, %p190
    %p192 = scmp.ne.s32.totalorder %s178, %s179
    %p193 = scmp.eq.s32.totalorder %s19, 1
    %p194 = por %p192, %p193
    %p196 = scmp.ne.s32.totalorder %s179, %s195
    %p197 = scmp.eq.s32.totalorder %s19, 0
    %p198 = por %p196, %p197
    %p199 = scmp.le.s32.totalorder 1, %s13
    %p200 = scmp.lt.s32.totalorder %s13, 3
    %p201 = pnand %p199, %p200
    %p202 = pneg %p201
    // Predicated region
    $region9: #{csshar_logit_forward.1} parent=5 // pred_check
      _
    $region10: #{csshar_logit_forward.1} parent=5 // pred_check_branch
      %204 = sbr.rel (%p201) target = $region12
    $region11: #{csshar_logit_forward.1} parent=5 // pred_region
      %s205 = ssub.s32 %s13, 1
      // Predicated region
      $region13: #{csshar_logit_forward.1} parent=11 // pred_check
        %p206 = pneg %p60
      $region14: #{csshar_logit_forward.1} parent=11 // pred_check_branch
        %208 = sbr.rel (%p206) target = $region16
      $region15: #{csshar_logit_forward.1} parent=11 // pred_region
        _
      $region16: #{csshar_logit_forward.1} parent=11 // pred_fallthru
        _
      // Predicated region
      $region17: #{csshar_logit_forward.1} parent=11 // pred_check
        %p209 = pneg %p81
      $region18: #{csshar_logit_forward.1} parent=11 // pred_check_branch
        %211 = sbr.rel (%p209) target = $region20
      $region19: #{csshar_logit_forward.1} parent=11 // pred_region
        _
      $region20: #{csshar_logit_forward.1} parent=11 // pred_fallthru
        _
      // Predicated region
      $region21: #{csshar_logit_forward.1} parent=11 // pred_check
        %p212 = pneg %p102
      $region22: #{csshar_logit_forward.1} parent=11 // pred_check_branch
        %214 = sbr.rel (%p212) target = $region24
      $region23: #{csshar_logit_forward.1} parent=11 // pred_region
        _
      $region24: #{csshar_logit_forward.1} parent=11 // pred_fallthru
        _
      // Predicated region
      $region25: #{csshar_logit_forward.1} parent=11 // pred_check
        %p215 = pneg %p123
      $region26: #{csshar_logit_forward.1} parent=11 // pred_check_branch
        %217 = sbr.rel (%p215) target = $region28
      $region27: #{csshar_logit_forward.1} parent=11 // pred_region
        _
      $region28: #{csshar_logit_forward.1} parent=11 // pred_fallthru
        _
      // Predicated region
      $region29: #{csshar_logit_forward.1} parent=11 // pred_check
        %p218 = pneg %p144
      $region30: #{csshar_logit_forward.1} parent=11 // pred_check_branch
        %220 = sbr.rel (%p218) target = $region32
      $region31: #{csshar_logit_forward.1} parent=11 // pred_region
        _
      $region32: #{csshar_logit_forward.1} parent=11 // pred_fallthru
        _
      // Predicated region
      $region33: #{csshar_logit_forward.1} parent=11 // pred_check
        %p221 = pneg %p165
      $region34: #{csshar_logit_forward.1} parent=11 // pred_check_branch
        %223 = sbr.rel (%p221) target = $region36
      $region35: #{csshar_logit_forward.1} parent=11 // pred_region
        _
      $region36: #{csshar_logit_forward.1} parent=11 // pred_fallthru
        _
    $region12: #{csshar_logit_forward.1} parent=5 // pred_fallthru
      _
    %p224 = scmp.lt.s32.totalorder %s13, 2
    // Predicated region
    $region37: #{csshar_logit_forward.1} parent=5 // pred_check
      %p225 = pneg %p224
    $region38: #{csshar_logit_forward.1} parent=5 // pred_check_branch
      %227 = sbr.rel (%p225) target = $region40
    $region39: #{csshar_logit_forward.1} parent=5 // pred_region
      // Predicated region
      $region41: #{csshar_logit_forward.1} parent=39 // pred_check
        %p228 = pneg %p33
      $region42: #{csshar_logit_forward.1} parent=39 // pred_check_branch
        %230 = sbr.rel (%p228) target = $region44
      $region43: #{csshar_logit_forward.1} parent=39 // pred_region
        %p231 = scmp.lt.s32.totalorder %s13, 1
        %s232 = scalar_select %p231, %s13, 1
        %s233 = smul.addr %s232, 2
        %s234 = smul.addr %s233, 4
        %s235 = scalar_lea.vmem %s0, %s234
      $region44: #{csshar_logit_forward.1} parent=39 // pred_fallthru
        _
    $region40: #{csshar_logit_forward.1} parent=5 // pred_fallthru
      _
    %p236 = scmp.le.s32.totalorder 1, %s13
    %p237 = scmp.lt.s32.totalorder %s13, 3
    %p238 = pnand %p236, %p237
    %p239 = pneg %p238
    // Predicated region
    $region45: #{csshar_logit_forward.1} parent=5 // pred_check
      _
    $region46: #{csshar_logit_forward.1} parent=5 // pred_check_branch
      %241 = sbr.rel (%p238) target = $region48
    $region47: #{csshar_logit_forward.1} parent=5 // pred_region
      %s242 = ssub.s32 %s13, 1
      %p243 = scmp.lt.s32.totalorder %s18, 1
      %s244 = scalar_select %p243, %s18, 1
      %s245 = smul.addr %s244, 2
      %s246 = smul.addr %s245, 4
      %s247 = scalar_lea.vmem %s0, %s246
      %p248 = pneg %p39
      %p249 = pneg %p36
      %p250 = pneg %p60
      %p251 = pneg %p57
      %p252 = pneg %p81
      %p253 = pneg %p78
      %p254 = pneg %p102
      %p255 = pneg %p99
      %p256 = pneg %p123
      %p257 = pneg %p120
      %p258 = pneg %p144
      %p259 = pneg %p141
      %p260 = pneg %p165
      %p261 = pneg %p162
      %p262 = pneg %p191
      %p263 = pneg %p188
      %p264 = scmp.lt.s32.totalorder %s18, 1
      %s265 = scalar_select %p264, %s18, 1
      %s266 = smul.addr %s265, 8
      %s267 = scalar_lea.vmem %s7, %s266
      %p268 = scmp.lt.s32.totalorder %s18, 1
      %s269 = scalar_select %p268, %s18, 1
      %s270 = smul.addr %s269, 2
      %s271 = smul.addr %s270, 4
      %s272 = scalar_lea.vmem %s0, %s271
      %p273 = scmp.lt.s32.totalorder %s18, 1
      %s274 = scalar_select %p273, %s18, 1
      %s275 = smul.addr %s274, 8
      %s276 = scalar_lea.vmem %s7, %s275
      %v278 = vld [vmem:[%s272] sm:$0xff]
      %v279 = vld [vmem:[%s1] sm:$0xf]
      %v280 = vld [vmem:[%s1 + $0x4] sm:$0xf]
      %v281 = vld [vmem:[%s1 + $0x8] sm:$0xf]
      %v282 = vld [vmem:[%s1 + $0xc] sm:$0xf]
      %v283 = vld [vmem:[%s1 + $0x10] sm:$0xf]
      %v284 = vld [vmem:[%s1 + $0x14] sm:$0xf]
      %v285 = vld [vmem:[%s1 + $0x18] sm:$0xf]
      %v286 = vld [vmem:[%s1 + $0x1c] sm:$0xf]
      %v287 = vld [vmem:[%s1 + $0x20] sm:$0xf]
      %v288 = vld [vmem:[%s1 + $0x24] sm:$0xf]
      %v289 = vld [vmem:[%s1 + $0x28] sm:$0xf]
      %v290 = vld [vmem:[%s1 + $0x2c] sm:$0xf]
      %v291 = vld [vmem:[%s1 + $0x30] sm:$0xf]
      %v292 = vld [vmem:[%s1 + $0x34] sm:$0xf]
      %v293 = vld [vmem:[%s1 + $0x38] sm:$0xf]
      %v294 = vld [vmem:[%s1 + $0x3c] sm:$0xf]
      %v295 = vld [vmem:[%s1 + $0x40] sm:$0xf]
      %v296 = vld [vmem:[%s1 + $0x44] sm:$0xf]
      %v297 = vld [vmem:[%s1 + $0x48] sm:$0xf]
      %v298 = vld [vmem:[%s1 + $0x4c] sm:$0xf]
      %v299 = vld [vmem:[%s1 + $0x50] sm:$0xf]
      %v300 = vld [vmem:[%s1 + $0x54] sm:$0xf]
      %v301 = vld [vmem:[%s1 + $0x58] sm:$0xf]
      %v302 = vld [vmem:[%s1 + $0x5c] sm:$0xf]
      %v303 = vld [vmem:[%s2] sm:$0x1]
      %v305 = vlaneseq
      %v306 = vshrl.u32 %v305, 7
      %v307 = vsub.s32 0, %v306
      %v308 = vrot.slane %v303, %v307
      %v311 = vunpack.c.l.b16 %v278
      %v312 = vunpack.c.h.b16 %v278
      %v313 = vpack.c.b16 %v311, %v311
      %v314 = vpack.c.b16 %v312, %v312
      %v340 = vunpack.c.l.b16 %v279
      %v341 = vunpack.c.l.b16 %v280
      %v342 = vunpack.c.l.b16 %v281
      %v343 = vunpack.c.l.b16 %v282
      %v344 = vunpack.c.l.b16 %v283
      %v345 = vunpack.c.l.b16 %v284
      %v346 = vunpack.c.l.b16 %v285
      %v347 = vunpack.c.l.b16 %v286
      %v348 = vunpack.c.l.b16 %v287
      %v349 = vunpack.c.l.b16 %v288
      %v350 = vunpack.c.l.b16 %v289
      %v351 = vunpack.c.l.b16 %v290
      %v352 = vunpack.c.l.b16 %v291
      %v353 = vunpack.c.l.b16 %v292
      %v354 = vunpack.c.l.b16 %v293
      %v355 = vunpack.c.l.b16 %v294
      %v356 = vunpack.c.l.b16 %v295
      %v357 = vunpack.c.l.b16 %v296
      %v358 = vunpack.c.l.b16 %v297
      %v359 = vunpack.c.l.b16 %v298
      %v360 = vunpack.c.l.b16 %v299
      %v361 = vunpack.c.l.b16 %v300
      %v362 = vunpack.c.l.b16 %v301
      %v363 = vunpack.c.l.b16 %v302
      %v364 = vpack.c.b16 %v341, %v340
      %v365 = vpack.c.b16 %v343, %v342
      %v366 = vpack.c.b16 %v345, %v344
      %v367 = vpack.c.b16 %v347, %v346
      %v368 = vpack.c.b16 %v349, %v348
      %v369 = vpack.c.b16 %v351, %v350
      %v370 = vpack.c.b16 %v353, %v352
      %v371 = vpack.c.b16 %v355, %v354
      %v372 = vpack.c.b16 %v357, %v356
      %v373 = vpack.c.b16 %v359, %v358
      %v374 = vpack.c.b16 %v361, %v360
      %v375 = vpack.c.b16 %v363, %v362
      %vm388 = vcmask 523264
      %v390 = vsel %vm388, %v314, 0
      %392 = vmatprep.subr.bf16.mxu0 0
      %393 = vmatpush1.bf16.msra.mxu0 %v364
      %394 = vmatprep.subr.bf16.mxu0 0
      %395 = vmatpush1.bf16.msra.mxu0 %v365
      %396 = vmatprep.subr.bf16.mxu0 0
      %397 = vmatpush1.bf16.msra.mxu0 %v366
      %398 = vmatprep.subr.bf16.mxu0 0
      %399 = vmatpush1.bf16.msra.mxu0 %v367
      %400 = vmatprep.subr.bf16.mxu0 0
      %401 = vmatpush1.bf16.msra.mxu0 %v368
      %402 = vmatprep.subr.bf16.mxu0 0
      %403 = vmatpush1.bf16.msra.mxu0 %v369
      %404 = vmatprep.subr.bf16.mxu0 0
      %405 = vmatpush1.bf16.msra.mxu0 %v370
      %406 = vmatprep.subr.bf16.mxu0 0
      %407 = vmatpush1.bf16.msra.mxu0 %v371
      %408 = vmatprep.subr.bf16.mxu0 0
      %409 = vmatpush1.bf16.msra.mxu0 %v372
      %410 = vmatprep.subr.bf16.mxu0 0
      %411 = vmatpush1.bf16.msra.mxu0 %v373
      %412 = vmatprep.subr.bf16.mxu0 0
      %413 = vmatpush1.bf16.msra.mxu0 %v374
      %414 = vmatprep.subr.bf16.mxu0 0
      %415 = vmatpush1.bf16.msra.mxu0 %v375
      %416 = vmatprep.subr.bf16.mxu0 0
      %417 = vmatpush1.bf16.msra.mxu0 0
      %418 = vmatprep.subr.bf16.mxu0 0
      %419 = vmatpush1.bf16.msra.mxu0 0
      %420 = vmatprep.subr.bf16.mxu0 0
      %421 = vmatpush1.bf16.msra.mxu0 0
      %422 = vmatprep.subr.bf16.mxu0 0
      %423 = vmatpush1.bf16.msra.mxu0 0
      %424 = vmatprep.mubr.bf16.mxu0 %v390
      %425 = vmatmul.mubr.bf16.gmra.mrb[0].mxu0 %v313
      %v426 = vpop.f32.mrb[0].mxu0
      %v427 = vadd.f32 %v308, %v426
      %v428 = vpop.f32.mrb[0].mxu0
      %v429 = vpop.f32.mrb[0].mxu0
      %v430 = vpop.f32.mrb[0].mxu0
      %431 = vdwg.mxu0
      %v432 = vmax.f32 %v427, 0.0
      %v433 = vpack.c.bf16 %v432, %v432
      %v434 = vld [vmem:[%s3] sm:$0xf]
      %v435 = vld [vmem:[%s3 + $0x4] sm:$0xf]
      %v436 = vld [vmem:[%s3 + $0x8] sm:$0xf]
      %v437 = vld [vmem:[%s3 + $0xc] sm:$0xf]
      %v438 = vld [vmem:[%s3 + $0x10] sm:$0xf]
      %v439 = vld [vmem:[%s3 + $0x14] sm:$0xf]
      %v440 = vld [vmem:[%s3 + $0x18] sm:$0xf]
      %v441 = vld [vmem:[%s3 + $0x1c] sm:$0xf]
      %v442 = vld [vmem:[%s3 + $0x20] sm:$0xf]
      %v443 = vld [vmem:[%s3 + $0x24] sm:$0xf]
      %v444 = vld [vmem:[%s3 + $0x28] sm:$0xf]
      %v445 = vld [vmem:[%s3 + $0x2c] sm:$0xf]
      %v446 = vld [vmem:[%s4] sm:$0x1]
      %v448 = vlaneseq
      %v449 = vshrl.u32 %v448, 7
      %v450 = vsub.s32 0, %v449
      %v451 = vrot.slane %v446, %v450
      %v465 = vunpack.c.l.b16 %v434
      %v466 = vunpack.c.l.b16 %v435
      %v467 = vunpack.c.l.b16 %v436
      %v468 = vunpack.c.l.b16 %v437
      %v469 = vunpack.c.l.b16 %v438
      %v470 = vunpack.c.l.b16 %v439
      %v471 = vunpack.c.l.b16 %v440
      %v472 = vunpack.c.l.b16 %v441
      %v473 = vunpack.c.l.b16 %v442
      %v474 = vunpack.c.l.b16 %v443
      %v475 = vunpack.c.l.b16 %v444
      %v476 = vunpack.c.l.b16 %v445
      %v477 = vpack.c.b16 %v466, %v465
      %v478 = vpack.c.b16 %v468, %v467
      %v479 = vpack.c.b16 %v470, %v469
      %v480 = vpack.c.b16 %v472, %v471
      %v481 = vpack.c.b16 %v474, %v473
      %v482 = vpack.c.b16 %v476, %v475
      %vm489 = vcmask 785408
      %v491 = vsel %vm489, %v433, 0
      %493 = vmatprep.subr.bf16.mxu0 0
      %494 = vmatpush1.bf16.msra.mxu0 %v477
      %495 = vmatprep.subr.bf16.mxu0 0
      %496 = vmatpush1.bf16.msra.mxu0 %v478
      %497 = vmatprep.subr.bf16.mxu0 0
      %498 = vmatpush1.bf16.msra.mxu0 %v479
      %499 = vmatprep.subr.bf16.mxu0 0
      %500 = vmatpush1.bf16.msra.mxu0 %v480
      %501 = vmatprep.subr.bf16.mxu0 0
      %502 = vmatpush1.bf16.msra.mxu0 %v481
      %503 = vmatprep.subr.bf16.mxu0 0
      %504 = vmatpush1.bf16.msra.mxu0 %v482
      %505 = vmatprep.subr.bf16.mxu0 0
      %506 = vmatpush1.bf16.msra.mxu0 0
      %507 = vmatprep.subr.bf16.mxu0 0
      %508 = vmatpush1.bf16.msra.mxu0 0
      %509 = vmatprep.subr.bf16.mxu0 0
      %510 = vmatpush1.bf16.msra.mxu0 0
      %511 = vmatprep.subr.bf16.mxu0 0
      %512 = vmatpush1.bf16.msra.mxu0 0
      %513 = vmatprep.subr.bf16.mxu0 0
      %514 = vmatpush1.bf16.msra.mxu0 0
      %515 = vmatprep.subr.bf16.mxu0 0
      %516 = vmatpush1.bf16.msra.mxu0 0
      %517 = vmatprep.subr.bf16.mxu0 0
      %518 = vmatpush1.bf16.msra.mxu0 0
      %519 = vmatprep.subr.bf16.mxu0 0
      %520 = vmatpush1.bf16.msra.mxu0 0
      %521 = vmatprep.subr.bf16.mxu0 0
      %522 = vmatpush1.bf16.msra.mxu0 0
      %523 = vmatprep.subr.bf16.mxu0 0
      %524 = vmatpush1.bf16.msra.mxu0 0
      %525 = vmatprep.mubr.bf16.mxu0 0
      %526 = vmatmul.mubr.bf16.gmra.mrb[0].mxu0 %v491
      %v527 = vpop.f32.mrb[0].mxu0
      %v528 = vadd.f32 %v451, %v527
      %v529 = vpop.f32.mrb[0].mxu0
      %v530 = vpop.f32.mrb[0].mxu0
      %v531 = vpop.f32.mrb[0].mxu0
      %532 = vdwg.mxu0
      %v533 = vmax.f32 %v528, 0.0
      %v534 = vpack.c.bf16 %v533, %v533
      %v535 = vld [vmem:[%s5] sm:$0xf]
      %v536 = vld [vmem:[%s5 + $0x4] sm:$0xf]
      %v537 = vld [vmem:[%s5 + $0x8] sm:$0xf]
      %v538 = vld [vmem:[%s5 + $0xc] sm:$0xf]
      %v539 = vld [vmem:[%s5 + $0x10] sm:$0xf]
      %v540 = vld [vmem:[%s5 + $0x14] sm:$0xf]
      %v541 = vld [vmem:[%s5 + $0x18] sm:$0xf]
      %v542 = vld [vmem:[%s5 + $0x1c] sm:$0xf]
      %v543 = vld [vmem:[%s6] sm:$0x1]
      %v545 = vlaneseq
      %v546 = vshrl.u32 %v545, 7
      %v547 = vsub.s32 0, %v546
      %v548 = vrot.slane %v543, %v547
      %v558 = vunpack.c.l.b16 %v535
      %v559 = vunpack.c.l.b16 %v536
      %v560 = vunpack.c.l.b16 %v537
      %v561 = vunpack.c.l.b16 %v538
      %v562 = vunpack.c.l.b16 %v539
      %v563 = vunpack.c.l.b16 %v540
      %v564 = vunpack.c.l.b16 %v541
      %v565 = vunpack.c.l.b16 %v542
      %v566 = vpack.c.b16 %v559, %v558
      %v567 = vpack.c.b16 %v561, %v560
      %v568 = vpack.c.b16 %v563, %v562
      %v569 = vpack.c.b16 %v565, %v564
      %v575 = vsel %vm388, %v534, 0
      %577 = vmatprep.subr.bf16.mxu0 0
      %578 = vmatpush1.bf16.msra.mxu0 %v566
      %579 = vmatprep.subr.bf16.mxu0 0
      %580 = vmatpush1.bf16.msra.mxu0 %v567
      %581 = vmatprep.subr.bf16.mxu0 0
      %582 = vmatpush1.bf16.msra.mxu0 %v568
      %583 = vmatprep.subr.bf16.mxu0 0
      %584 = vmatpush1.bf16.msra.mxu0 %v569
      %585 = vmatprep.subr.bf16.mxu0 0
      %586 = vmatpush1.bf16.msra.mxu0 0
      %587 = vmatprep.subr.bf16.mxu0 0
      %588 = vmatpush1.bf16.msra.mxu0 0
      %589 = vmatprep.subr.bf16.mxu0 0
      %590 = vmatpush1.bf16.msra.mxu0 0
      %591 = vmatprep.subr.bf16.mxu0 0
      %592 = vmatpush1.bf16.msra.mxu0 0
      %593 = vmatprep.subr.bf16.mxu0 0
      %594 = vmatpush1.bf16.msra.mxu0 0
      %595 = vmatprep.subr.bf16.mxu0 0
      %596 = vmatpush1.bf16.msra.mxu0 0
      %597 = vmatprep.subr.bf16.mxu0 0
      %598 = vmatpush1.bf16.msra.mxu0 0
      %599 = vmatprep.subr.bf16.mxu0 0
      %600 = vmatpush1.bf16.msra.mxu0 0
      %601 = vmatprep.subr.bf16.mxu0 0
      %602 = vmatpush1.bf16.msra.mxu0 0
      %603 = vmatprep.subr.bf16.mxu0 0
      %604 = vmatpush1.bf16.msra.mxu0 0
      %605 = vmatprep.subr.bf16.mxu0 0
      %606 = vmatpush1.bf16.msra.mxu0 0
      %607 = vmatprep.subr.bf16.mxu0 0
      %608 = vmatpush1.bf16.msra.mxu0 0
      %609 = vmatprep.mubr.bf16.mxu0 0
      %610 = vmatmul.mubr.bf16.gmra.mrb[0].mxu0 %v575
      %v611 = vpop.f32.mrb[0].mxu0
      %v612 = vadd.f32 %v548, %v611
      %v613 = vpop.f32.mrb[0].mxu0
      %v614 = vpop.f32.mrb[0].mxu0
      %v615 = vpop.f32.mrb[0].mxu0
      %616 = vdwg.mxu0
      %617 = vst [vmem:[%s276] sm:$0xff] %v612
      %p618 = scmp.lt.s32.totalorder %s18, 1
      %s619 = scalar_select %p618, %s18, 1
      %s620 = smul.addr %s619, 8
      %s621 = scalar_lea.vmem %s7, %s620
      // Predicated region
      $region49: #{csshar_logit_forward.1} parent=47 // pred_check
        %p622 = pneg %p188
      $region50: #{csshar_logit_forward.1} parent=47 // pred_check_branch
        %624 = sbr.rel (%p622) target = $region52
      $region51: #{csshar_logit_forward.1} parent=47 // pred_region
        _
      $region52: #{csshar_logit_forward.1} parent=47 // pred_fallthru
        _
    $region48: #{csshar_logit_forward.1} parent=5 // pred_fallthru
      _
    %p625 = scmp.le.s32.totalorder 2, %s13
    // Predicated region
    $region53: #{csshar_logit_forward.1} parent=5 // pred_check
      %p626 = pneg %p625
    $region54: #{csshar_logit_forward.1} parent=5 // pred_check_branch
      %628 = sbr.rel (%p626) target = $region56
    $region55: #{csshar_logit_forward.1} parent=5 // pred_region
      %s629 = ssub.s32 %s13, 2
      // Predicated region
      $region57: #{csshar_logit_forward.1} parent=55 // pred_check
        %p630 = pneg %p194
      $region58: #{csshar_logit_forward.1} parent=55 // pred_check_branch
        %632 = sbr.rel (%p630) target = $region60
      $region59: #{csshar_logit_forward.1} parent=55 // pred_region
        %p633 = scmp.lt.s32.totalorder %s19, 1
        %s634 = scalar_select %p633, %s19, 1
        %s635 = smul.addr %s634, 8
        %s636 = scalar_lea.vmem %s7, %s635
      $region60: #{csshar_logit_forward.1} parent=55 // pred_fallthru
        _
    $region56: #{csshar_logit_forward.1} parent=5 // pred_fallthru
      _
  $region6: #{csshar_logit_forward.1} parent=0 // loop_footer
    %s17 = sadd.s32 1, %s13
  $region7: #{csshar_logit_forward.1} parent=0 // loop_footer_branch
    %12 = sbr.rel target = $region3
  $region8: #{csshar_logit_forward.1} parent=0 // loop_exit
    _

</llo_original>
